<compile_context>
chip_gen: v7x
topology: tpu7x:2x2x1
jax: 0.10.0
libtpu: 0.0.40
codegen_flags: <defaults>
</compile_context>

<pallas_src>
import jax
import jax.numpy as jnp
from jax import lax
from jax.experimental import pallas as pl
from jax.experimental.pallas import tpu as pltpu


def _round_up(x, m):
    return ((x + m - 1) // m) * m


def _ffn_kernel(x_ref, w12_ref, w3_ref, o_ref, acc_ref):
    # x_ref  : (tm, D)    bf16  token tile, resident across the H axis
    # w12_ref: (2*th, D)  bf16  [W1 tile ; W2 tile] rows (PyTorch [out, in])
    # w3_ref : (th, D)    bf16  W3^T rows (pre-transposed at weight-load time)
    # o_ref  : (tm, D)    bf16
    # acc_ref: (tm, D)    f32   resident accumulator across the H axis
    h = pl.program_id(1)
    th = w3_ref.shape[0]

    x = x_ref[...]
    # Single NT matmul for both gates: contract D (last dim of both operands).
    # The [out, in] layout keeps the weight DMA contiguous; the transposed
    # contraction runs on the MXU transposed-push path (no XLU transpose of
    # the activation tile).
    nt = (((1,), (1,)), ((), ()))
    h12 = lax.dot_general(x, w12_ref[...], nt, preferred_element_type=jnp.float32)
    h1 = h12[:, :th]
    h2 = h12[:, th:]

    # SiLU(h1) * h2 in f32 (sigmoid on the EUP slot); cast to bf16 only for
    # the second MXU pass.  Never written back to HBM.
    gated = (h1 * jax.nn.sigmoid(h1) * h2).astype(w3_ref.dtype)

    # Partial fc3: (tm, th) @ (th, D) -> (tm, D), NN-form on the MXU.
    part = jnp.dot(gated, w3_ref[...], preferred_element_type=jnp.float32)

    @pl.when(h == 0)
    def _():
        acc_ref[...] = part          # assign: skips a full (tm, D) zero-store

    @pl.when(h != 0)
    def _():
        acc_ref[...] += part

    @pl.when(h == pl.num_programs(1) - 1)
    def _():
        o_ref[...] = acc_ref[...].astype(o_ref.dtype)


def _vmem_footprint_bytes(tm, th, d):
    # Conservative: every BlockSpec operand double-buffered + resident f32 acc.
    x_b = 2 * tm * d * 2
    w12_b = 2 * (2 * th) * d * 2
    w3_b = 2 * th * d * 2
    out_b = 2 * tm * d * 2
    acc_b = tm * d * 4
    return x_b + w12_b + w3_b + out_b + acc_b


def _select_config(m, d, h, tm=None, th=None):
    kind = ""
    try:
        kind = jax.devices()[0].device_kind.lower()
    except Exception:
        pass
    is_v7 = "v7" in kind
    is_v6 = "v6" in kind

    vmem_cap = None
    try:
        cap = int(pltpu.get_tpu_info().vmem_capacity_bytes)
        if cap > 0:
            vmem_cap = cap
    except Exception:
        vmem_cap = None
    if vmem_cap is None:
        vmem_cap = (64 if is_v7 else 128) * 1024 * 1024

    # Leave headroom for compiler internal scratch / DMA buffering; never ask
    # for the entire physical VMEM (critical on 64 MiB v7x).
    vmem_limit = max(32 * 1024 * 1024,
                     min(vmem_cap - 16 * 1024 * 1024, 112 * 1024 * 1024))
    budget = vmem_limit - 8 * 1024 * 1024

    auto_tm = tm is None
    if auto_tm:
        # Weights are re-streamed once per token tile, so arithmetic intensity
        # ~ tm FLOPs/byte: ~1024 on v6e (128 MiB VMEM, high roofline knee),
        # ~512 on v7x (64 MiB VMEM) and on v5e (knee already met at ~512).
        tm = 1024 if is_v6 else 512
    if th is None:
        th = 512

    # Clamp to the problem and to layout-friendly multiples.
    tm = max(16, _round_up(min(tm, _round_up(m, 16)), 16))
    th = max(128, _round_up(min(th, _round_up(h, 128)), 128))

    if is_v7 and auto_tm and m > 16:
        # Keep >= 2 token tiles so both v7x TensorCores get work (decode case).
        tm = min(tm, max(16, _round_up(-(-m // 2), 16)))

    # Shrink until the tile footprint fits the per-generation VMEM budget.
    # Shrink th first (it only amortizes per-step overhead); tm sets the
    # weight re-streaming factor and is the last thing we give up.
    while _vmem_footprint_bytes(tm, th, d) > budget:
        if th > 256:
            th //= 2
        elif tm > 128:
            tm //= 2
        elif th > 128:
            th //= 2
        else:
            break

    return tm, th, vmem_limit


def _prepare_weights(w1, w2, w3, th):
    """One-time weight layout prep (hoist to weight-load time in a real model).

    Returns:
      w12  : [2*H_pad, D] where block h (2*th rows) = [W1 tile h ; W2 tile h]
      w3t  : [H_pad, D]   = W3^T, contiguous (th, D) row blocks
      H_pad: H rounded up to a multiple of th.  Zero padding is mathematically
             inert for SwiGLU: silu(0) * 0 = 0 and zero W3^T rows add nothing.
    """
    hdim, d = w1.shape
    h_pad = _round_up(hdim, th)
    if h_pad != hdim:
        w1 = jnp.pad(w1, ((0, h_pad - hdim), (0, 0)))
        w2 = jnp.pad(w2, ((0, h_pad - hdim), (0, 0)))
        w3 = jnp.pad(w3, ((0, 0), (0, h_pad - hdim)))
    nh = h_pad // th
    w12 = jnp.concatenate(
        [w1.reshape(nh, th, d), w2.reshape(nh, th, d)], axis=1
    ).reshape(2 * h_pad, d)
    w3t = w3.T  # [H_pad, D]
    return w12, w3t, h_pad


def feed_forward(x, w1, w2, w3, *, tm=None, th=None):
    """SwiGLU FFN matching the PyTorch FeedForward module.

    x  : [B, S, D] bf16
    w1 : [H, D]  (fc1.weight, PyTorch [out, in] layout)
    w2 : [H, D]  (fc2.weight)
    w3 : [D, H]  (fc3.weight)
    """
    B, S, D = x.shape
    H, D1 = w1.shape
    assert D1 == D and w2.shape == (H, D) and w3.shape == (D, H)

    M = B * S
    x2d = x.reshape(M, D)

    tm, th, vmem_limit = _select_config(M, D, H, tm=tm, th=th)

    # One-time weight layout (interleave W1||W2, transpose + pad W3).  In a
    # full model this is hoisted to weight-conversion time, not per call.
    w12, w3t, H_pad = _prepare_weights(w1, w2, w3, th)

    M_pad = _round_up(M, tm)
    if M_pad != M:
        x2d = jnp.pad(x2d, ((0, M_pad - M), (0, 0)))

    grid_m = M_pad // tm
    grid_h = H_pad // th

    # Advisory cost for XLA's scheduler; weights are re-streamed per token tile.
    cost = pl.CostEstimate(
        flops=6 * M_pad * D * H_pad,
        transcendentals=M_pad * H_pad,
        bytes_accessed=grid_m * 3 * H_pad * D * 2 + 2 * M_pad * D * 2,
    )

    out2d = pl.pallas_call(
        _ffn_kernel,
        out_shape=jax.ShapeDtypeStruct((M_pad, D), x.dtype),
        grid_spec=pltpu.PrefetchScalarGridSpec(
            num_scalar_prefetch=0,
            grid=(grid_m, grid_h),
            in_specs=[
                pl.BlockSpec((tm, D), lambda i, h: (i, 0)),       # x (resident over h)
                pl.BlockSpec((2 * th, D), lambda i, h: (h, 0)),   # [W1 ; W2] rows
                pl.BlockSpec((th, D), lambda i, h: (h, 0)),       # W3^T rows
            ],
            out_specs=pl.BlockSpec((tm, D), lambda i, h: (i, 0)),
            scratch_shapes=[pltpu.VMEM((tm, D), jnp.float32)],
        ),
        compiler_params=pltpu.CompilerParams(
            dimension_semantics=("parallel", "arbitrary"),
            vmem_limit_bytes=vmem_limit,
        ),
        cost_estimate=cost,
    )(x2d, w12, w3t)

    if M_pad != M:
        out2d = out2d[:M]
    return out2d.reshape(B, S, D)


if __name__ == "__main__":
    # Small stand-ins for Llama2 (emb_dim=4096, hidden_dim=11008) that still
    # exercise token padding (M=120 -> 128) and hidden padding (H=448 -> 512).
    B, S = 2, 60
    D, H = 256, 448
    dtype = jnp.bfloat16

    key = jax.random.PRNGKey(0)
    kx, k1, k2, k3 = jax.random.split(key, 4)

    x = jax.random.normal(kx, (B, S, D), jnp.float32).astype(dtype)

    # nn.Linear default init: U(-1/sqrt(fan_in), 1/sqrt(fan_in)), bias=False.
    b1 = 1.0 / (D ** 0.5)
    b3 = 1.0 / (H ** 0.5)
    w1 = jax.random.uniform(k1, (H, D), jnp.float32, -b1, b1).astype(dtype)
    w2 = jax.random.uniform(k2, (H, D), jnp.float32, -b1, b1).astype(dtype)
    w3 = jax.random.uniform(k3, (D, H), jnp.float32, -b3, b3).astype(dtype)

    # Explicit small tiles: exercises multi-step grid on both axes.
    out = feed_forward(x, w1, w2, w3, tm=64, th=256)
    jax.block_until_ready(out)
    assert out.shape == (B, S, D) and out.dtype == dtype

    # Reference mirroring the bf16 PyTorch chain (f32 MXU accumulation,
    # bf16 intermediate activations).
    x2 = x.reshape(-1, D)
    h1 = jnp.dot(x2, w1.T, preferred_element_type=jnp.float32)
    h2 = jnp.dot(x2, w2.T, preferred_element_type=jnp.float32)
    gated = (h1 * jax.nn.sigmoid(h1) * h2).astype(dtype)
    ref = (
        jnp.dot(gated, w3.T, preferred_element_type=jnp.float32)
        .astype(dtype)
        .reshape(B, S, D)
    )
    err = jnp.max(jnp.abs(out.astype(jnp.float32) - ref.astype(jnp.float32)))
    assert float(err) < 1e-1, f"max abs err {float(err)}"

    # Auto-config path (per-generation tm / th / vmem_limit selection).
    out_auto = feed_forward(x, w1, w2, w3)
    jax.block_until_ready(out_auto)
    err2 = jnp.max(jnp.abs(out_auto.astype(jnp.float32) - ref.astype(jnp.float32)))
    assert float(err2) < 1e-1, f"max abs err (auto) {float(err2)}"

    print("KERNEL_OK")
</pallas_src>

<mosaic_0001>
module attributes {stable_mosaic.version = 11 : i64} {
  func.func @_ffn_kernel(%arg0: i32, %arg1: i32, %arg2: memref<64x256xbf16, #tpu.memory_space<vmem>>, %arg3: memref<512x256xbf16, #tpu.memory_space<vmem>>, %arg4: memref<256x256xbf16, #tpu.memory_space<vmem>>, %arg5: memref<64x256xbf16, #tpu.memory_space<vmem>>, %arg6: memref<64x256xf32, #tpu.memory_space<vmem>>) attributes {dimension_semantics = [#tpu.dimension_semantics<parallel>, #tpu.dimension_semantics<arbitrary>], iteration_bounds = array<i64: 2, 2>, scalar_prefetch = 0 : i64, scratch_operands = 1 : i64, tpu.core_type = #tpu.core_type<tc>, window_params = [{transform_indices = @transform_0, window_bounds = array<i64: 64, 256>}, {transform_indices = @transform_1, window_bounds = array<i64: 512, 256>}, {transform_indices = @transform_2, window_bounds = array<i64: 256, 256>}, {transform_indices = @transform_3, window_bounds = array<i64: 64, 256>}]} {
    %c0 = arith.constant 0 : index
    %c0_0 = arith.constant 0 : index
    %0 = vector.load %arg2[%c0, %c0_0] : memref<64x256xbf16, #tpu.memory_space<vmem>>, vector<64x256xbf16>
    %c0_1 = arith.constant 0 : index
    %c0_2 = arith.constant 0 : index
    %1 = vector.load %arg3[%c0_1, %c0_2] : memref<512x256xbf16, #tpu.memory_space<vmem>>, vector<512x256xbf16>
    %cst = arith.constant dense<0.000000e+00> : vector<64x512xf32>
    %2 = tpu.matmul %0, %1, %cst {dimension_numbers = #tpu.dot_dimension_numbers<[1], [1], [0], [0], [0, 0, 1, 0], [], []>} : vector<64x256xbf16>, vector<512x256xbf16>, vector<64x512xf32> -> vector<64x512xf32>
    %3 = vector.extract_strided_slice %2 {offsets = [0, 0], sizes = [64, 256], strides = [1, 1]} : vector<64x512xf32> to vector<64x256xf32>
    %4 = vector.extract_strided_slice %2 {offsets = [0, 256], sizes = [64, 256], strides = [1, 1]} : vector<64x512xf32> to vector<64x256xf32>
    %5 = arith.negf %3 : vector<64x256xf32>
    %6 = math.exp %5 : vector<64x256xf32>
    %cst_3 = arith.constant 1.000000e+00 : f32
    %7 = vector.broadcast %cst_3 : f32 to vector<64x256xf32>
    %8 = arith.addf %7, %6 : vector<64x256xf32>
    %9 = arith.divf %7, %8 : vector<64x256xf32>
    %10 = arith.mulf %3, %9 : vector<64x256xf32>
    %11 = arith.mulf %10, %4 : vector<64x256xf32>
    %12 = arith.truncf %11 : vector<64x256xf32> to vector<64x256xbf16>
    %c0_4 = arith.constant 0 : index
    %c0_5 = arith.constant 0 : index
    %13 = vector.load %arg4[%c0_4, %c0_5] : memref<256x256xbf16, #tpu.memory_space<vmem>>, vector<256x256xbf16>
    %cst_6 = arith.constant dense<0.000000e+00> : vector<64x256xf32>
    %14 = tpu.matmul %12, %13, %cst_6 {dimension_numbers = #tpu.dot_dimension_numbers<[1], [0], [0], [1], [0, 0, 1, 1], [], []>} : vector<64x256xbf16>, vector<256x256xbf16>, vector<64x256xf32> -> vector<64x256xf32>
    %c0_i32 = arith.constant 0 : i32
    %15 = arith.cmpi eq, %arg1, %c0_i32 : i32
    %16 = arith.extui %15 : i1 to i32
    %c0_i32_7 = arith.constant 0 : i32
    %17 = arith.cmpi ne, %16, %c0_i32_7 : i32
    scf.if %17 {
      %c0_11 = arith.constant 0 : index
      %c0_12 = arith.constant 0 : index
      %24 = vector.load %arg6[%c0_11, %c0_12] : memref<64x256xf32, #tpu.memory_space<vmem>>, vector<64x256xf32>
      tpu.vector_store %arg6[%c0_11, %c0_12], %14 {strides = array<i32>} : memref<64x256xf32, #tpu.memory_space<vmem>>, vector<64x256xf32>,
    } else {
    }
    %c0_i32_8 = arith.constant 0 : i32
    %18 = arith.cmpi ne, %arg1, %c0_i32_8 : i32
    %19 = arith.extui %18 : i1 to i32
    %c0_i32_9 = arith.constant 0 : i32
    %20 = arith.cmpi ne, %19, %c0_i32_9 : i32
    scf.if %20 {
      %c0_11 = arith.constant 0 : index
      %c0_12 = arith.constant 0 : index
      %24 = vector.load %arg6[%c0_11, %c0_12] : memref<64x256xf32, #tpu.memory_space<vmem>>, vector<64x256xf32>
      %25 = arith.addf %24, %14 : vector<64x256xf32>
      %c0_13 = arith.constant 0 : index
      %c0_14 = arith.constant 0 : index
      %26 = vector.load %arg6[%c0_13, %c0_14] : memref<64x256xf32, #tpu.memory_space<vmem>>, vector<64x256xf32>
      tpu.vector_store %arg6[%c0_13, %c0_14], %25 {strides = array<i32>} : memref<64x256xf32, #tpu.memory_space<vmem>>, vector<64x256xf32>,
    } else {
    }
    %c1_i32 = arith.constant 1 : i32
    %21 = arith.cmpi eq, %arg1, %c1_i32 : i32
    %22 = arith.extui %21 : i1 to i32
    %c0_i32_10 = arith.constant 0 : i32
    %23 = arith.cmpi ne, %22, %c0_i32_10 : i32
    scf.if %23 {
      %c0_11 = arith.constant 0 : index
      %c0_12 = arith.constant 0 : index
      %24 = vector.load %arg6[%c0_11, %c0_12] : memref<64x256xf32, #tpu.memory_space<vmem>>, vector<64x256xf32>
      %25 = arith.truncf %24 : vector<64x256xf32> to vector<64x256xbf16>
      %c0_13 = arith.constant 0 : index
      %c0_14 = arith.constant 0 : index
      %26 = vector.load %arg5[%c0_13, %c0_14] : memref<64x256xbf16, #tpu.memory_space<vmem>>, vector<64x256xbf16>
      tpu.vector_store %arg5[%c0_13, %c0_14], %25 {strides = array<i32>} : memref<64x256xbf16, #tpu.memory_space<vmem>>, vector<64x256xbf16>,
    } else {
    }
    return
  }
  func.func @transform_0(%arg0: i32, %arg1: i32) -> (i32, i32) {
    %c0_i32 = arith.constant 0 : i32
    %c0_i32_0 = arith.constant 0 : i32
    return %arg0, %c0_i32 : i32, i32
  }
  func.func @transform_1(%arg0: i32, %arg1: i32) -> (i32, i32) {
    %c0_i32 = arith.constant 0 : i32
    %c0_i32_0 = arith.constant 0 : i32
    return %arg1, %c0_i32 : i32, i32
  }
  func.func @transform_2(%arg0: i32, %arg1: i32) -> (i32, i32) {
    %c0_i32 = arith.constant 0 : i32
    %c0_i32_0 = arith.constant 0 : i32
    return %arg1, %c0_i32 : i32, i32
  }
  func.func @transform_3(%arg0: i32, %arg1: i32) -> (i32, i32) {
    %c0_i32 = arith.constant 0 : i32
    %c0_i32_0 = arith.constant 0 : i32
    return %arg0, %c0_i32 : i32, i32
  }
}

</mosaic_0001>

<llo_original>
// kernel: tpu_custom_call.1
$region0: #{tpu_custom_call.1}
  #allocation0 [shape = 'u32[]', space=smem, size = 0x4, offset = 0x4, fixed_abs, tag = 'smem constant byte address 0x4 - core index']
  #allocation1 [shape = 'u32[144,128]{1,0:T(1,128)}', space=vmem, size = 0x12000, scoped, tag = 'internal scratch']
  #allocation2 [shape = 'f32[64,256]{1,0:T(8,128)}', space=vmem, size = 0x10000, scoped, tag = 'scratch operand']
  %s0 = inlined_call_operand.hbm [shape: bf16[128,256], index: 0, kind: input, shape index: {}]
  %s1 = inlined_call_operand.hbm [shape: bf16[1024,256], index: 1, kind: input, shape index: {}]
  %s2 = inlined_call_operand.hbm [shape: bf16[512,256], index: 2, kind: input, shape index: {}]
  %s3 = inlined_call_operand.hbm [shape: bf16[128,256], index: 3, kind: output, shape index: {}]
  %s4 = sld [smem:[#allocation0]]
  $region69: #{tpu_custom_call.1} parent=0
    _
  %s6 = ssub.s32 1, %s4
  %s7 = scalar_select 0, %s6, %s4
  $region1: #{tpu_custom_call.1} parent=0
    #allocation3 [shape = 'u8[65536]{0}', space=vmem, size = 0x10000, scoped, tag = 'input window, operand 0']
    #allocation4 [shape = 's32[2]{0}', space=sflag, size = 0x8, scoped, tag = 'scoped memory for tpu_custom_call.1']
    #allocation5 [shape = 's32[2]{0}', space=sflag, size = 0x8, scoped, tag = 'scoped memory for tpu_custom_call.1']
    #allocation6 [shape = 'u8[524288]{0}', space=vmem, size = 0x80000, scoped, tag = 'input window, operand 1']
    #allocation7 [shape = 's32[2]{0}', space=sflag, size = 0x8, scoped, tag = 'scoped memory for tpu_custom_call.1']
    #allocation8 [shape = 'u8[262144]{0}', space=vmem, size = 0x40000, scoped, tag = 'input window, operand 2']
    #allocation9 [shape = 'u8[65536]{0}', space=vmem, size = 0x10000, scoped, tag = 'output window, operand 0']
    %8 = vsyncpa [#allocation4], 0
    %s9 = scalar_lea.sflag [#allocation4], 1
    %10 = vsyncpa %s9, 0
    %11 = vsyncpa [#allocation7], 0
    %s12 = scalar_lea.sflag [#allocation7], 1
    %13 = vsyncpa %s12, 0
    %14 = vsyncpa [#allocation5], 0
    %s15 = scalar_lea.sflag [#allocation5], 1
    %16 = vsyncpa %s15, 0
    loop: start=0, step=1, limit=6
    $region2: #{tpu_custom_call.1} parent=1 // loop_pre_header
      _
    $region3: #{tpu_custom_call.1} parent=1 // loop_header
      %s18 = sphi 0, %s22
      %p19 = scmp.ge.s32.totalorder %s18, 6
      %s25 = sphi 0, %s37
      %s26 = sphi 0, %s33
      %s27 = sphi 0, %s25
      %s28 = sphi 0, %s26
      %s29 = sphi 0, %s27
      %s30 = sphi 0, %s28
      %s40 = sphi 0, %s42
      %s43 = sphi 0, %s40
      %s44 = sphi 0, %s43
      %s60 = sphi 0, %s44
      %s66 = sphi 0, %s68
      %s69 = sphi 0, %s66
      %s70 = sphi 0, %s69
      %s86 = sphi 0, %s70
      %s92 = sphi 0, %s94
      %s95 = sphi 0, %s92
      %s96 = sphi 0, %s95
      %s112 = sphi 0, %s96
      %s118 = sphi 0, %s120
      %s121 = sphi 0, %s118
      %s122 = sphi 0, %s121
      %s138 = sphi 0, %s122
    $region4: #{tpu_custom_call.1} parent=1 // loop_header_branch
      %21 = sbr.rel (%p19) target = $region8
    $region5: #{tpu_custom_call.1} parent=1 // loop_body
      %s23 = ssub.s32 %s18, 1
      %s24 = ssub.s32 %s18, 2
      %s31 = sadd.s32 1, %s26
      %p32 = scmp.ge.s32.totalorder %s31, 2
      %s33 = scalar_select %p32, 0, %s31
      %s34 = sadd.s32 1, %s25
      %s35 = scalar_select %p32, %s34, %s25
      %p36 = scmp.ge.s32.totalorder %s35, 2
      %s37 = scalar_select %p36, 0, %s35
      %s38 = ssub.s32 %s25, %s37
      %p39 = scmp.eq.s32.totalorder %s38, 0
      %s41 = sadd.s32 %s40, 1
      %s42 = scalar_select %p39, %s40, %s41
      %p45 = pneg %p39
      %p46 = scmp.eq.s32.totalorder %s18, 3
      %p47 = por %p45, %p46
      %p48 = scmp.ne.s32.totalorder %s40, %s43
      %p49 = scmp.eq.s32.totalorder %s18, 0
      %p50 = por %p48, %p49
      %p51 = scmp.ne.s32.totalorder %s40, %s43
      %p52 = scmp.eq.s32.totalorder %s23, 3
      %p53 = por %p51, %p52
      %p54 = scmp.ne.s32.totalorder %s43, %s44
      %p55 = scmp.eq.s32.totalorder %s23, 0
      %p56 = por %p54, %p55
      %p57 = scmp.ne.s32.totalorder %s43, %s44
      %p58 = scmp.eq.s32.totalorder %s24, 3
      %p59 = por %p57, %p58
      %p61 = scmp.ne.s32.totalorder %s44, %s60
      %p62 = scmp.eq.s32.totalorder %s24, 0
      %p63 = por %p61, %p62
      %s64 = ssub.s32 %s26, %s33
      %p65 = scmp.eq.s32.totalorder %s64, 0
      %s67 = sadd.s32 %s66, 1
      %s68 = scalar_select %p65, %s66, %s67
      %p71 = pneg %p65
      %p72 = scmp.eq.s32.totalorder %s18, 3
      %p73 = por %p71, %p72
      %p74 = scmp.ne.s32.totalorder %s66, %s69
      %p75 = scmp.eq.s32.totalorder %s18, 0
      %p76 = por %p74, %p75
      %p77 = scmp.ne.s32.totalorder %s66, %s69
      %p78 = scmp.eq.s32.totalorder %s23, 3
      %p79 = por %p77, %p78
      %p80 = scmp.ne.s32.totalorder %s69, %s70
      %p81 = scmp.eq.s32.totalorder %s23, 0
      %p82 = por %p80, %p81
      %p83 = scmp.ne.s32.totalorder %s69, %s70
      %p84 = scmp.eq.s32.totalorder %s24, 3
      %p85 = por %p83, %p84
      %p87 = scmp.ne.s32.totalorder %s70, %s86
      %p88 = scmp.eq.s32.totalorder %s24, 0
      %p89 = por %p87, %p88
      %s90 = ssub.s32 %s26, %s33
      %p91 = scmp.eq.s32.totalorder %s90, 0
      %s93 = sadd.s32 %s92, 1
      %s94 = scalar_select %p91, %s92, %s93
      %p97 = pneg %p91
      %p98 = scmp.eq.s32.totalorder %s18, 3
      %p99 = por %p97, %p98
      %p100 = scmp.ne.s32.totalorder %s92, %s95
      %p101 = scmp.eq.s32.totalorder %s18, 0
      %p102 = por %p100, %p101
      %p103 = scmp.ne.s32.totalorder %s92, %s95
      %p104 = scmp.eq.s32.totalorder %s23, 3
      %p105 = por %p103, %p104
      %p106 = scmp.ne.s32.totalorder %s95, %s96
      %p107 = scmp.eq.s32.totalorder %s23, 0
      %p108 = por %p106, %p107
      %p109 = scmp.ne.s32.totalorder %s95, %s96
      %p110 = scmp.eq.s32.totalorder %s24, 3
      %p111 = por %p109, %p110
      %p113 = scmp.ne.s32.totalorder %s96, %s112
      %p114 = scmp.eq.s32.totalorder %s24, 0
      %p115 = por %p113, %p114
      %s116 = ssub.s32 %s25, %s37
      %p117 = scmp.eq.s32.totalorder %s116, 0
      %s119 = sadd.s32 %s118, 1
      %s120 = scalar_select %p117, %s118, %s119
      %p123 = pneg %p117
      %p124 = scmp.eq.s32.totalorder %s18, 3
      %p125 = por %p123, %p124
      %p126 = scmp.ne.s32.totalorder %s118, %s121
      %p127 = scmp.eq.s32.totalorder %s18, 0
      %p128 = por %p126, %p127
      %p129 = scmp.ne.s32.totalorder %s118, %s121
      %p130 = scmp.eq.s32.totalorder %s23, 3
      %p131 = por %p129, %p130
      %p132 = scmp.ne.s32.totalorder %s121, %s122
      %p133 = scmp.eq.s32.totalorder %s23, 0
      %p134 = por %p132, %p133
      %p135 = scmp.ne.s32.totalorder %s121, %s122
      %p136 = scmp.eq.s32.totalorder %s24, 3
      %p137 = por %p135, %p136
      %p139 = scmp.ne.s32.totalorder %s122, %s138
      %p140 = scmp.eq.s32.totalorder %s24, 0
      %p141 = por %p139, %p140
      %p142 = scmp.le.s32.totalorder 1, %s18
      %p143 = scmp.lt.s32.totalorder %s18, 5
      %p144 = pnand %p142, %p143
      %p145 = pneg %p144
      // Predicated region
      $region9: #{tpu_custom_call.1} parent=5 // pred_check
        _
      $region10: #{tpu_custom_call.1} parent=5 // pred_check_branch
        %147 = sbr.rel (%p144) target = $region12
      $region11: #{tpu_custom_call.1} parent=5 // pred_region
        %s148 = ssub.s32 %s18, 1
      $region12: #{tpu_custom_call.1} parent=5 // pred_fallthru
        _
      %p149 = scmp.lt.s32.totalorder %s18, 4
      // Predicated region
      $region13: #{tpu_custom_call.1} parent=5 // pred_check
        %p150 = pneg %p149
      $region14: #{tpu_custom_call.1} parent=5 // pred_check_branch
        %152 = sbr.rel (%p150) target = $region16
      $region15: #{tpu_custom_call.1} parent=5 // pred_region
        // Predicated region
        $region17: #{tpu_custom_call.1} parent=15 // pred_check
          %p153 = pneg %p50
        $region18: #{tpu_custom_call.1} parent=15 // pred_check_branch
          %155 = sbr.rel (%p153) target = $region20
        $region19: #{tpu_custom_call.1} parent=15 // pred_region
          %s156 = sand.u32 %s40, 1
          %s157 = scalar_lea.sflag [#allocation4], %s156
          %s158 = sand.u32 %s40, 1
          %s159 = smul.addr %s158, 64
          %s160 = scalar_lea.vmem [#allocation3], %s159
          %s161 = smul.u32 8, %s25
          %s163 = ssub.s32 1024, 1024
          %164 = vsyncadd %s157, %s163
          %s165 = smul.addr %s161, 2
          %s166 = smul.addr %s165, 64
          %s167 = scalar_lea.hbm %s0, %s166
          %s168 = sshll.u32 %s160, 4
          %s169 = int_to_ptr.vmem [resolvable:$true] %s168
          %174 = dma.hbm_to_vmem [thread:$0]  %s167, 1024, %s169, %s157, 128, 128, 8
        $region20: #{tpu_custom_call.1} parent=15 // pred_fallthru
          _
        // Predicated region
        $region21: #{tpu_custom_call.1} parent=15 // pred_check
          %p175 = pneg %p76
        $region22: #{tpu_custom_call.1} parent=15 // pred_check_branch
          %177 = sbr.rel (%p175) target = $region24
        $region23: #{tpu_custom_call.1} parent=15 // pred_region
          %s178 = sand.u32 %s18, 1
          %s179 = scalar_lea.sflag [#allocation7], %s178
          %s180 = sand.u32 %s66, 1
          %s181 = smul.addr %s180, 512
          %s182 = scalar_lea.vmem [#allocation6], %s181
          %s183 = smul.u32 64, %s26
          %s185 = ssub.s32 8192, 8192
          %186 = vsyncadd %s179, %s185
          %s187 = smul.addr %s183, 2
          %s188 = smul.addr %s187, 64
          %s189 = scalar_lea.hbm %s1, %s188
          %s190 = sshll.u32 %s182, 4
          %s191 = int_to_ptr.vmem [resolvable:$true] %s190
          %196 = dma.hbm_to_vmem [thread:$0]  %s189, 8192, %s191, %s179, 128, 128, 8
        $region24: #{tpu_custom_call.1} parent=15 // pred_fallthru
          _
        // Predicated region
        $region25: #{tpu_custom_call.1} parent=15 // pred_check
          %p197 = pneg %p102
        $region26: #{tpu_custom_call.1} parent=15 // pred_check_branch
          %199 = sbr.rel (%p197) target = $region28
        $region27: #{tpu_custom_call.1} parent=15 // pred_region
          %s200 = sand.u32 %s18, 1
          %s201 = scalar_lea.sflag [#allocation7], %s200
          %s202 = sand.u32 %s92, 1
          %s203 = smul.addr %s202, 256
          %s204 = scalar_lea.vmem [#allocation8], %s203
          %s205 = smul.u32 32, %s26
          %s207 = ssub.s32 4096, 4096
          %208 = vsyncadd %s201, %s207
          %s209 = smul.addr %s205, 2
          %s210 = smul.addr %s209, 64
          %s211 = scalar_lea.hbm %s2, %s210
          %s212 = sshll.u32 %s204, 4
          %s213 = int_to_ptr.vmem [resolvable:$true] %s212
          %218 = dma.hbm_to_vmem [thread:$0]  %s211, 4096, %s213, %s201, 128, 128, 8
        $region28: #{tpu_custom_call.1} parent=15 // pred_fallthru
          _
      $region16: #{tpu_custom_call.1} parent=5 // pred_fallthru
        _
      %p219 = scmp.le.s32.totalorder 1, %s18
      %p220 = scmp.lt.s32.totalorder %s18, 5
      %p221 = pnand %p219, %p220
      %p222 = pneg %p221
      // Predicated region
      $region29: #{tpu_custom_call.1} parent=5 // pred_check
        _
      $region30: #{tpu_custom_call.1} parent=5 // pred_check_branch
        %224 = sbr.rel (%p221) target = $region32
      $region31: #{tpu_custom_call.1} parent=5 // pred_region
        %s225 = ssub.s32 %s18, 1
        %s226 = sand.u32 %s43, 1
        %s227 = scalar_lea.sflag [#allocation4], %s226
        %s228 = sand.u32 %s43, 1
        %s229 = smul.addr %s228, 64
        %s230 = scalar_lea.vmem [#allocation3], %s229
        // Predicated region
        $region33: #{tpu_custom_call.1} parent=31 // pred_check
          %p231 = pneg %p56
        $region34: #{tpu_custom_call.1} parent=31 // pred_check_branch
          %233 = sbr.rel (%p231) target = $region36
        $region35: #{tpu_custom_call.1} parent=31 // pred_region
          %234 = dma.done %s227, 1024
        $region36: #{tpu_custom_call.1} parent=31 // pred_fallthru
          _
        %s235 = sand.u32 %s23, 1
        %s236 = scalar_lea.sflag [#allocation7], %s235
        %s237 = sand.u32 %s69, 1
        %s238 = smul.addr %s237, 512
        %s239 = scalar_lea.vmem [#allocation6], %s238
        // Predicated region
        $region37: #{tpu_custom_call.1} parent=31 // pred_check
          %p240 = pneg %p82
        $region38: #{tpu_custom_call.1} parent=31 // pred_check_branch
          %242 = sbr.rel (%p240) target = $region40
        $region39: #{tpu_custom_call.1} parent=31 // pred_region
          %243 = dma.done %s236, 8192
        $region40: #{tpu_custom_call.1} parent=31 // pred_fallthru
          _
        %s244 = sand.u32 %s23, 1
        %s245 = scalar_lea.sflag [#allocation7], %s244
        %s246 = sand.u32 %s95, 1
        %s247 = smul.addr %s246, 256
        %s248 = scalar_lea.vmem [#allocation8], %s247
        // Predicated region
        $region41: #{tpu_custom_call.1} parent=31 // pred_check
          %p249 = pneg %p108
        $region42: #{tpu_custom_call.1} parent=31 // pred_check_branch
          %251 = sbr.rel (%p249) target = $region44
        $region43: #{tpu_custom_call.1} parent=31 // pred_region
          %252 = dma.done %s245, 4096
        $region44: #{tpu_custom_call.1} parent=31 // pred_fallthru
          _
        %s253 = sand.u32 %s43, 1
        %s254 = scalar_lea.sflag [#allocation4], %s253
        %s255 = sand.u32 %s43, 1
        %s256 = smul.addr %s255, 64
        %s257 = scalar_lea.vmem [#allocation3], %s256
        %p258 = pneg %p56
        %p259 = pneg %p53
        %s260 = sand.u32 %s23, 1
        %s261 = scalar_lea.sflag [#allocation7], %s260
        %s262 = sand.u32 %s69, 1
        %s263 = smul.addr %s262, 512
        %s264 = scalar_lea.vmem [#allocation6], %s263
        %p265 = pneg %p82
        %p266 = pneg %p79
        %s267 = sand.u32 %s23, 1
        %s268 = scalar_lea.sflag [#allocation7], %s267
        %s269 = sand.u32 %s95, 1
        %s270 = smul.addr %s269, 256
        %s271 = scalar_lea.vmem [#allocation8], %s270
        %p272 = pneg %p108
        %p273 = pneg %p105
        %p274 = pneg %p134
        %p275 = pneg %p131
        %s276 = sand.u32 %s121, 1
        %s277 = scalar_lea.sflag [#allocation5], %s276
        %s278 = sand.u32 %s121, 1
        %s279 = smul.addr %s278, 64
        %s280 = scalar_lea.vmem [#allocation9], %s279
        %s281 = smul.u32 8, %s27
        %s282 = smul.u32 64, %s28
        %s283 = smul.u32 32, %s28
        %s284 = smul.u32 8, %s27
        %v285 = vld [vmem:[%s230] sm:$0xff]
        %v286 = vld [vmem:[%s230 + $0x8] sm:$0xff]
        %v287 = vld [vmem:[%s230 + $0x10] sm:$0xff]
        %v288 = vld [vmem:[%s230 + $0x18] sm:$0xff]
        %v289 = vld [vmem:[%s230 + $0x20] sm:$0xff]
        %v290 = vld [vmem:[%s230 + $0x28] sm:$0xff]
        %v291 = vld [vmem:[%s230 + $0x30] sm:$0xff]
        %v292 = vld [vmem:[%s230 + $0x38] sm:$0xff]
        %v293 = vld [vmem:[%s239] sm:$0xff]
        %v294 = vld [vmem:[%s239 + $0x8] sm:$0xff]
        %v295 = vld [vmem:[%s239 + $0x10] sm:$0xff]
        %v296 = vld [vmem:[%s239 + $0x18] sm:$0xff]
        %v297 = vld [vmem:[%s239 + $0x20] sm:$0xff]
        %v298 = vld [vmem:[%s239 + $0x28] sm:$0xff]
        %v299 = vld [vmem:[%s239 + $0x30] sm:$0xff]
        %v300 = vld [vmem:[%s239 + $0x38] sm:$0xff]
        %v301 = vld [vmem:[%s239 + $0x40] sm:$0xff]
        %v302 = vld [vmem:[%s239 + $0x48] sm:$0xff]
        %v303 = vld [vmem:[%s239 + $0x50] sm:$0xff]
        %v304 = vld [vmem:[%s239 + $0x58] sm:$0xff]
        %v305 = vld [vmem:[%s239 + $0x60] sm:$0xff]
        %v306 = vld [vmem:[%s239 + $0x68] sm:$0xff]
        %v307 = vld [vmem:[%s239 + $0x70] sm:$0xff]
        %v308 = vld [vmem:[%s239 + $0x78] sm:$0xff]
        %v309 = vld [vmem:[%s239 + $0x80] sm:$0xff]
        %v310 = vld [vmem:[%s239 + $0x88] sm:$0xff]
        %v311 = vld [vmem:[%s239 + $0x90] sm:$0xff]
        %v312 = vld [vmem:[%s239 + $0x98] sm:$0xff]
        %v313 = vld [vmem:[%s239 + $0xa0] sm:$0xff]
        %v314 = vld [vmem:[%s239 + $0xa8] sm:$0xff]
        %v315 = vld [vmem:[%s239 + $0xb0] sm:$0xff]
        %v316 = vld [vmem:[%s239 + $0xb8] sm:$0xff]
        %v317 = vld [vmem:[%s239 + $0xc0] sm:$0xff]
        %v318 = vld [vmem:[%s239 + $0xc8] sm:$0xff]
        %v319 = vld [vmem:[%s239 + $0xd0] sm:$0xff]
        %v320 = vld [vmem:[%s239 + $0xd8] sm:$0xff]
        %v321 = vld [vmem:[%s239 + $0xe0] sm:$0xff]
        %v322 = vld [vmem:[%s239 + $0xe8] sm:$0xff]
        %v323 = vld [vmem:[%s239 + $0xf0] sm:$0xff]
        %v324 = vld [vmem:[%s239 + $0xf8] sm:$0xff]
        %v325 = vld [vmem:[%s239 + $0x100] sm:$0xff]
        %v326 = vld [vmem:[%s239 + $0x108] sm:$0xff]
        %v327 = vld [vmem:[%s239 + $0x110] sm:$0xff]
        %v328 = vld [vmem:[%s239 + $0x118] sm:$0xff]
        %v329 = vld [vmem:[%s239 + $0x120] sm:$0xff]
        %v330 = vld [vmem:[%s239 + $0x128] sm:$0xff]
        %v331 = vld [vmem:[%s239 + $0x130] sm:$0xff]
        %v332 = vld [vmem:[%s239 + $0x138] sm:$0xff]
        %v333 = vld [vmem:[%s239 + $0x140] sm:$0xff]
        %v334 = vld [vmem:[%s239 + $0x148] sm:$0xff]
        %v335 = vld [vmem:[%s239 + $0x150] sm:$0xff]
        %v336 = vld [vmem:[%s239 + $0x158] sm:$0xff]
        %v337 = vld [vmem:[%s239 + $0x160] sm:$0xff]
        %v338 = vld [vmem:[%s239 + $0x168] sm:$0xff]
        %v339 = vld [vmem:[%s239 + $0x170] sm:$0xff]
        %v340 = vld [vmem:[%s239 + $0x178] sm:$0xff]
        %v341 = vld [vmem:[%s239 + $0x180] sm:$0xff]
        %v342 = vld [vmem:[%s239 + $0x188] sm:$0xff]
        %v343 = vld [vmem:[%s239 + $0x190] sm:$0xff]
        %v344 = vld [vmem:[%s239 + $0x198] sm:$0xff]
        %v345 = vld [vmem:[%s239 + $0x1a0] sm:$0xff]
        %v346 = vld [vmem:[%s239 + $0x1a8] sm:$0xff]
        %v347 = vld [vmem:[%s239 + $0x1b0] sm:$0xff]
        %v348 = vld [vmem:[%s239 + $0x1b8] sm:$0xff]
        %v349 = vld [vmem:[%s239 + $0x1c0] sm:$0xff]
        %v350 = vld [vmem:[%s239 + $0x1c8] sm:$0xff]
        %v351 = vld [vmem:[%s239 + $0x1d0] sm:$0xff]
        %v352 = vld [vmem:[%s239 + $0x1d8] sm:$0xff]
        %v353 = vld [vmem:[%s239 + $0x1e0] sm:$0xff]
        %v354 = vld [vmem:[%s239 + $0x1e8] sm:$0xff]
        %v355 = vld [vmem:[%s239 + $0x1f0] sm:$0xff]
        %v356 = vld [vmem:[%s239 + $0x1f8] sm:$0xff]
        %v365 = vunpack.c.l.b16 %v285
        %v366 = vunpack.c.h.b16 %v285
        %v367 = vunpack.c.l.b16 %v286
        %v368 = vunpack.c.h.b16 %v286
        %v369 = vunpack.c.l.b16 %v287
        %v370 = vunpack.c.h.b16 %v287
        %v371 = vunpack.c.l.b16 %v288
        %v372 = vunpack.c.h.b16 %v288
        %v373 = vunpack.c.l.b16 %v289
        %v374 = vunpack.c.h.b16 %v289
        %v375 = vunpack.c.l.b16 %v290
        %v376 = vunpack.c.h.b16 %v290
        %v377 = vunpack.c.l.b16 %v291
        %v378 = vunpack.c.h.b16 %v291
        %v379 = vunpack.c.l.b16 %v292
        %v380 = vunpack.c.h.b16 %v292
        %v381 = vpack.c.b16 %v367, %v365
        %v382 = vpack.c.b16 %v368, %v366
        %v383 = vpack.c.b16 %v371, %v369
        %v384 = vpack.c.b16 %v372, %v370
        %v385 = vpack.c.b16 %v375, %v373
        %v386 = vpack.c.b16 %v376, %v374
        %v387 = vpack.c.b16 %v379, %v377
        %v388 = vpack.c.b16 %v380, %v378
        %v461 = vunpack.c.l.b16 %v293
        %v462 = vunpack.c.h.b16 %v293
        %v463 = vunpack.c.l.b16 %v294
        %v464 = vunpack.c.h.b16 %v294
        %v465 = vunpack.c.l.b16 %v295
        %v466 = vunpack.c.h.b16 %v295
        %v467 = vunpack.c.l.b16 %v296
        %v468 = vunpack.c.h.b16 %v296
        %v469 = vunpack.c.l.b16 %v297
        %v470 = vunpack.c.h.b16 %v297
        %v471 = vunpack.c.l.b16 %v298
        %v472 = vunpack.c.h.b16 %v298
        %v473 = vunpack.c.l.b16 %v299
        %v474 = vunpack.c.h.b16 %v299
        %v475 = vunpack.c.l.b16 %v300
        %v476 = vunpack.c.h.b16 %v300
        %v477 = vunpack.c.l.b16 %v301
        %v478 = vunpack.c.h.b16 %v301
        %v479 = vunpack.c.l.b16 %v302
        %v480 = vunpack.c.h.b16 %v302
        %v481 = vunpack.c.l.b16 %v303
        %v482 = vunpack.c.h.b16 %v303
        %v483 = vunpack.c.l.b16 %v304
        %v484 = vunpack.c.h.b16 %v304
        %v485 = vunpack.c.l.b16 %v305
        %v486 = vunpack.c.h.b16 %v305
        %v487 = vunpack.c.l.b16 %v306
        %v488 = vunpack.c.h.b16 %v306
        %v489 = vunpack.c.l.b16 %v307
        %v490 = vunpack.c.h.b16 %v307
        %v491 = vunpack.c.l.b16 %v308
        %v492 = vunpack.c.h.b16 %v308
        %v493 = vunpack.c.l.b16 %v309
        %v494 = vunpack.c.h.b16 %v309
        %v495 = vunpack.c.l.b16 %v310
        %v496 = vunpack.c.h.b16 %v310
        %v497 = vunpack.c.l.b16 %v311
        %v498 = vunpack.c.h.b16 %v311
        %v499 = vunpack.c.l.b16 %v312
        %v500 = vunpack.c.h.b16 %v312
        %v501 = vunpack.c.l.b16 %v313
        %v502 = vunpack.c.h.b16 %v313
        %v503 = vunpack.c.l.b16 %v314
        %v504 = vunpack.c.h.b16 %v314
        %v505 = vunpack.c.l.b16 %v315
        %v506 = vunpack.c.h.b16 %v315
        %v507 = vunpack.c.l.b16 %v316
        %v508 = vunpack.c.h.b16 %v316
        %v509 = vunpack.c.l.b16 %v317
        %v510 = vunpack.c.h.b16 %v317
        %v511 = vunpack.c.l.b16 %v318
        %v512 = vunpack.c.h.b16 %v318
        %v513 = vunpack.c.l.b16 %v319
        %v514 = vunpack.c.h.b16 %v319
        %v515 = vunpack.c.l.b16 %v320
        %v516 = vunpack.c.h.b16 %v320
        %v517 = vunpack.c.l.b16 %v321
        %v518 = vunpack.c.h.b16 %v321
        %v519 = vunpack.c.l.b16 %v322
        %v520 = vunpack.c.h.b16 %v322
        %v521 = vunpack.c.l.b16 %v323
        %v522 = vunpack.c.h.b16 %v323
        %v523 = vunpack.c.l.b16 %v324
        %v524 = vunpack.c.h.b16 %v324
        %v525 = vunpack.c.l.b16 %v325
        %v526 = vunpack.c.h.b16 %v325
        %v527 = vunpack.c.l.b16 %v326
        %v528 = vunpack.c.h.b16 %v326
        %v529 = vunpack.c.l.b16 %v327
        %v530 = vunpack.c.h.b16 %v327
        %v531 = vunpack.c.l.b16 %v328
        %v532 = vunpack.c.h.b16 %v328
        %v533 = vunpack.c.l.b16 %v329
        %v534 = vunpack.c.h.b16 %v329
        %v535 = vunpack.c.l.b16 %v330
        %v536 = vunpack.c.h.b16 %v330
        %v537 = vunpack.c.l.b16 %v331
        %v538 = vunpack.c.h.b16 %v331
        %v539 = vunpack.c.l.b16 %v332
        %v540 = vunpack.c.h.b16 %v332
        %v541 = vunpack.c.l.b16 %v333
        %v542 = vunpack.c.h.b16 %v333
        %v543 = vunpack.c.l.b16 %v334
        %v544 = vunpack.c.h.b16 %v334
        %v545 = vunpack.c.l.b16 %v335
        %v546 = vunpack.c.h.b16 %v335
        %v547 = vunpack.c.l.b16 %v336
        %v548 = vunpack.c.h.b16 %v336
        %v549 = vunpack.c.l.b16 %v337
        %v550 = vunpack.c.h.b16 %v337
        %v551 = vunpack.c.l.b16 %v338
        %v552 = vunpack.c.h.b16 %v338
        %v553 = vunpack.c.l.b16 %v339
        %v554 = vunpack.c.h.b16 %v339
        %v555 = vunpack.c.l.b16 %v340
        %v556 = vunpack.c.h.b16 %v340
        %v557 = vunpack.c.l.b16 %v341
        %v558 = vunpack.c.h.b16 %v341
        %v559 = vunpack.c.l.b16 %v342
        %v560 = vunpack.c.h.b16 %v342
        %v561 = vunpack.c.l.b16 %v343
        %v562 = vunpack.c.h.b16 %v343
        %v563 = vunpack.c.l.b16 %v344
        %v564 = vunpack.c.h.b16 %v344
        %v565 = vunpack.c.l.b16 %v345
        %v566 = vunpack.c.h.b16 %v345
        %v567 = vunpack.c.l.b16 %v346
        %v568 = vunpack.c.h.b16 %v346
        %v569 = vunpack.c.l.b16 %v347
        %v570 = vunpack.c.h.b16 %v347
        %v571 = vunpack.c.l.b16 %v348
        %v572 = vunpack.c.h.b16 %v348
        %v573 = vunpack.c.l.b16 %v349
        %v574 = vunpack.c.h.b16 %v349
        %v575 = vunpack.c.l.b16 %v350
        %v576 = vunpack.c.h.b16 %v350
        %v577 = vunpack.c.l.b16 %v351
        %v578 = vunpack.c.h.b16 %v351
        %v579 = vunpack.c.l.b16 %v352
        %v580 = vunpack.c.h.b16 %v352
        %v581 = vunpack.c.l.b16 %v353
        %v582 = vunpack.c.h.b16 %v353
        %v583 = vunpack.c.l.b16 %v354
        %v584 = vunpack.c.h.b16 %v354
        %v585 = vunpack.c.l.b16 %v355
        %v586 = vunpack.c.h.b16 %v355
        %v587 = vunpack.c.l.b16 %v356
        %v588 = vunpack.c.h.b16 %v356
        %v589 = vpack.c.b16 %v463, %v461
        %v590 = vpack.c.b16 %v464, %v462
        %v591 = vpack.c.b16 %v467, %v465
        %v592 = vpack.c.b16 %v468, %v466
        %v593 = vpack.c.b16 %v471, %v469
        %v594 = vpack.c.b16 %v472, %v470
        %v595 = vpack.c.b16 %v475, %v473
        %v596 = vpack.c.b16 %v476, %v474
        %v597 = vpack.c.b16 %v479, %v477
        %v598 = vpack.c.b16 %v480, %v478
        %v599 = vpack.c.b16 %v483, %v481
        %v600 = vpack.c.b16 %v484, %v482
        %v601 = vpack.c.b16 %v487, %v485
        %v602 = vpack.c.b16 %v488, %v486
        %v603 = vpack.c.b16 %v491, %v489
        %v604 = vpack.c.b16 %v492, %v490
        %v605 = vpack.c.b16 %v495, %v493
        %v606 = vpack.c.b16 %v496, %v494
        %v607 = vpack.c.b16 %v499, %v497
        %v608 = vpack.c.b16 %v500, %v498
        %v609 = vpack.c.b16 %v503, %v501
        %v610 = vpack.c.b16 %v504, %v502
        %v611 = vpack.c.b16 %v507, %v505
        %v612 = vpack.c.b16 %v508, %v506
        %v613 = vpack.c.b16 %v511, %v509
        %v614 = vpack.c.b16 %v512, %v510
        %v615 = vpack.c.b16 %v515, %v513
        %v616 = vpack.c.b16 %v516, %v514
        %v617 = vpack.c.b16 %v519, %v517
        %v618 = vpack.c.b16 %v520, %v518
        %v619 = vpack.c.b16 %v523, %v521
        %v620 = vpack.c.b16 %v524, %v522
        %v621 = vpack.c.b16 %v527, %v525
        %v622 = vpack.c.b16 %v528, %v526
        %v623 = vpack.c.b16 %v531, %v529
        %v624 = vpack.c.b16 %v532, %v530
        %v625 = vpack.c.b16 %v535, %v533
        %v626 = vpack.c.b16 %v536, %v534
        %v627 = vpack.c.b16 %v539, %v537
        %v628 = vpack.c.b16 %v540, %v538
        %v629 = vpack.c.b16 %v543, %v541
        %v630 = vpack.c.b16 %v544, %v542
        %v631 = vpack.c.b16 %v547, %v545
        %v632 = vpack.c.b16 %v548, %v546
        %v633 = vpack.c.b16 %v551, %v549
        %v634 = vpack.c.b16 %v552, %v550
        %v635 = vpack.c.b16 %v555, %v553
        %v636 = vpack.c.b16 %v556, %v554
        %v637 = vpack.c.b16 %v559, %v557
        %v638 = vpack.c.b16 %v560, %v558
        %v639 = vpack.c.b16 %v563, %v561
        %v640 = vpack.c.b16 %v564, %v562
        %v641 = vpack.c.b16 %v567, %v565
        %v642 = vpack.c.b16 %v568, %v566
        %v643 = vpack.c.b16 %v571, %v569
        %v644 = vpack.c.b16 %v572, %v570
        %v645 = vpack.c.b16 %v575, %v573
        %v646 = vpack.c.b16 %v576, %v574
        %v647 = vpack.c.b16 %v579, %v577
        %v648 = vpack.c.b16 %v580, %v578
        %v649 = vpack.c.b16 %v583, %v581
        %v650 = vpack.c.b16 %v584, %v582
        %v651 = vpack.c.b16 %v587, %v585
        %v652 = vpack.c.b16 %v588, %v586
        %717 = vmatprep.subr.bf16.mxu0 %v590
        %718 = vmatpush1.bf16.xpose.msra.mxu0 %v589
        %719 = vmatprep.subr.bf16.mxu0 %v592
        %720 = vmatpush1.bf16.xpose.msra.mxu0 %v591
        %721 = vmatprep.subr.bf16.mxu0 %v594
        %722 = vmatpush1.bf16.xpose.msra.mxu0 %v593
        %723 = vmatprep.subr.bf16.mxu0 %v596
        %724 = vmatpush1.bf16.xpose.msra.mxu0 %v595
        %725 = vmatprep.subr.bf16.mxu0 %v598
        %726 = vmatpush1.bf16.xpose.msra.mxu0 %v597
        %727 = vmatprep.subr.bf16.mxu0 %v600
        %728 = vmatpush1.bf16.xpose.msra.mxu0 %v599
        %729 = vmatprep.subr.bf16.mxu0 %v602
        %730 = vmatpush1.bf16.xpose.msra.mxu0 %v601
        %731 = vmatprep.subr.bf16.mxu0 %v604
        %732 = vmatpush1.bf16.xpose.msra.mxu0 %v603
        %733 = vmatprep.subr.bf16.mxu0 %v606
        %734 = vmatpush1.bf16.xpose.msra.mxu0 %v605
        %735 = vmatprep.subr.bf16.mxu0 %v608
        %736 = vmatpush1.bf16.xpose.msra.mxu0 %v607
        %737 = vmatprep.subr.bf16.mxu0 %v610
        %738 = vmatpush1.bf16.xpose.msra.mxu0 %v609
        %739 = vmatprep.subr.bf16.mxu0 %v612
        %740 = vmatpush1.bf16.xpose.msra.mxu0 %v611
        %741 = vmatprep.subr.bf16.mxu0 %v614
        %742 = vmatpush1.bf16.xpose.msra.mxu0 %v613
        %743 = vmatprep.subr.bf16.mxu0 %v616
        %744 = vmatpush1.bf16.xpose.msra.mxu0 %v615
        %745 = vmatprep.subr.bf16.mxu0 %v618
        %746 = vmatpush1.bf16.xpose.msra.mxu0 %v617
        %747 = vmatprep.subr.bf16.mxu0 %v620
        %748 = vmatpush1.bf16.xpose.msra.mxu0 %v619
        %749 = vmatprep.mubr.bf16.mxu0 %v382
        %750 = vmatmul.mubr.bf16.gmra.mrb[0].mxu0 %v381
        %v751 = vpop.f32.mrb[0].mxu0
        %v752 = vadd.f32 0.0, %v751
        %v753 = vpop.f32.mrb[0].mxu0
        %v754 = vadd.f32 0.0, %v753
        %v755 = vpop.f32.mrb[0].mxu0
        %v756 = vadd.f32 0.0, %v755
        %v757 = vpop.f32.mrb[0].mxu0
        %v758 = vadd.f32 0.0, %v757
        %759 = vmatprep.mubr.bf16.mxu0 %v384
        %760 = vmatmul.mubr.bf16.gmra.mrb[0].mxu0 %v383
        %v761 = vpop.f32.mrb[0].mxu0
        %v762 = vadd.f32 0.0, %v761
        %v763 = vpop.f32.mrb[0].mxu0
        %v764 = vadd.f32 0.0, %v763
        %v765 = vpop.f32.mrb[0].mxu0
        %v766 = vadd.f32 0.0, %v765
        %v767 = vpop.f32.mrb[0].mxu0
        %v768 = vadd.f32 0.0, %v767
        %769 = vmatprep.mubr.bf16.mxu0 %v386
        %770 = vmatmul.mubr.bf16.gmra.mrb[0].mxu0 %v385
        %v771 = vpop.f32.mrb[0].mxu0
        %v772 = vadd.f32 0.0, %v771
        %v773 = vpop.f32.mrb[0].mxu0
        %v774 = vadd.f32 0.0, %v773
        %v775 = vpop.f32.mrb[0].mxu0
        %v776 = vadd.f32 0.0, %v775
        %v777 = vpop.f32.mrb[0].mxu0
        %v778 = vadd.f32 0.0, %v777
        %779 = vmatprep.mubr.bf16.mxu0 %v388
        %780 = vmatmul.mubr.bf16.gmra.mrb[0].mxu0 %v387
        %v781 = vpop.f32.mrb[0].mxu0
        %v782 = vadd.f32 0.0, %v781
        %v783 = vpop.f32.mrb[0].mxu0
        %v784 = vadd.f32 0.0, %v783
        %v785 = vpop.f32.mrb[0].mxu0
        %v786 = vadd.f32 0.0, %v785
        %v787 = vpop.f32.mrb[0].mxu0
        %v788 = vadd.f32 0.0, %v787
        %789 = vdwg.mxu0
        %790 = vmatprep.subr.bf16.mxu0 %v622
        %791 = vmatpush1.bf16.xpose.msra.mxu0 %v621
        %792 = vmatprep.subr.bf16.mxu0 %v624
        %793 = vmatpush1.bf16.xpose.msra.mxu0 %v623
        %794 = vmatprep.subr.bf16.mxu0 %v626
        %795 = vmatpush1.bf16.xpose.msra.mxu0 %v625
        %796 = vmatprep.subr.bf16.mxu0 %v628
        %797 = vmatpush1.bf16.xpose.msra.mxu0 %v627
        %798 = vmatprep.subr.bf16.mxu0 %v630
        %799 = vmatpush1.bf16.xpose.msra.mxu0 %v629
        %800 = vmatprep.subr.bf16.mxu0 %v632
        %801 = vmatpush1.bf16.xpose.msra.mxu0 %v631
        %802 = vmatprep.subr.bf16.mxu0 %v634
        %803 = vmatpush1.bf16.xpose.msra.mxu0 %v633
        %804 = vmatprep.subr.bf16.mxu0 %v636
        %805 = vmatpush1.bf16.xpose.msra.mxu0 %v635
        %806 = vmatprep.subr.bf16.mxu0 %v638
        %807 = vmatpush1.bf16.xpose.msra.mxu0 %v637
        %808 = vmatprep.subr.bf16.mxu0 %v640
        %809 = vmatpush1.bf16.xpose.msra.mxu0 %v639
        %810 = vmatprep.subr.bf16.mxu0 %v642
        %811 = vmatpush1.bf16.xpose.msra.mxu0 %v641
        %812 = vmatprep.subr.bf16.mxu0 %v644
        %813 = vmatpush1.bf16.xpose.msra.mxu0 %v643
        %814 = vmatprep.subr.bf16.mxu0 %v646
        %815 = vmatpush1.bf16.xpose.msra.mxu0 %v645
        %816 = vmatprep.subr.bf16.mxu0 %v648
        %817 = vmatpush1.bf16.xpose.msra.mxu0 %v647
        %818 = vmatprep.subr.bf16.mxu0 %v650
        %819 = vmatpush1.bf16.xpose.msra.mxu0 %v649
        %820 = vmatprep.subr.bf16.mxu0 %v652
        %821 = vmatpush1.bf16.xpose.msra.mxu0 %v651
        %822 = vmatprep.mubr.bf16.mxu0 %v382
        %823 = vmatmul.mubr.bf16.gmra.mrb[0].mxu0 %v381
        %v824 = vpop.f32.mrb[0].mxu0
        %v825 = vadd.f32 0.0, %v824
        %v826 = vpop.f32.mrb[0].mxu0
        %v827 = vadd.f32 0.0, %v826
        %v828 = vpop.f32.mrb[0].mxu0
        %v829 = vadd.f32 0.0, %v828
        %v830 = vpop.f32.mrb[0].mxu0
        %v831 = vadd.f32 0.0, %v830
        %832 = vmatprep.mubr.bf16.mxu0 %v384
        %833 = vmatmul.mubr.bf16.gmra.mrb[0].mxu0 %v383
        %v834 = vpop.f32.mrb[0].mxu0
        %v835 = vadd.f32 0.0, %v834
        %v836 = vpop.f32.mrb[0].mxu0
        %v837 = vadd.f32 0.0, %v836
        %v838 = vpop.f32.mrb[0].mxu0
        %v839 = vadd.f32 0.0, %v838
        %v840 = vpop.f32.mrb[0].mxu0
        %v841 = vadd.f32 0.0, %v840
        %842 = vmatprep.mubr.bf16.mxu0 %v386
        %843 = vmatmul.mubr.bf16.gmra.mrb[0].mxu0 %v385
        %v844 = vpop.f32.mrb[0].mxu0
        %v845 = vadd.f32 0.0, %v844
        %v846 = vpop.f32.mrb[0].mxu0
        %v847 = vadd.f32 0.0, %v846
        %v848 = vpop.f32.mrb[0].mxu0
        %v849 = vadd.f32 0.0, %v848
        %v850 = vpop.f32.mrb[0].mxu0
        %v851 = vadd.f32 0.0, %v850
        %852 = vmatprep.mubr.bf16.mxu0 %v388
        %853 = vmatmul.mubr.bf16.gmra.mrb[0].mxu0 %v387
        %v854 = vpop.f32.mrb[0].mxu0
        %v855 = vadd.f32 0.0, %v854
        %v856 = vpop.f32.mrb[0].mxu0
        %v857 = vadd.f32 0.0, %v856
        %v858 = vpop.f32.mrb[0].mxu0
        %v859 = vadd.f32 0.0, %v858
        %v860 = vpop.f32.mrb[0].mxu0
        %v861 = vadd.f32 0.0, %v860
        %862 = vdwg.mxu0
        %v863 = vxor.u32 %v752, 2147483648
        %v864 = vxor.u32 %v754, 2147483648
        %v865 = vxor.u32 %v756, 2147483648
        %v866 = vxor.u32 %v758, 2147483648
        %v867 = vxor.u32 %v762, 2147483648
        %v868 = vxor.u32 %v764, 2147483648
        %v869 = vxor.u32 %v766, 2147483648
        %v870 = vxor.u32 %v768, 2147483648
        %v871 = vxor.u32 %v772, 2147483648
        %v872 = vxor.u32 %v774, 2147483648
        %v873 = vxor.u32 %v776, 2147483648
        %v874 = vxor.u32 %v778, 2147483648
        %v875 = vxor.u32 %v782, 2147483648
        %v876 = vxor.u32 %v784, 2147483648
        %v877 = vxor.u32 %v786, 2147483648
        %v878 = vxor.u32 %v788, 2147483648
        %v879 = vmul.f32 %v863, 1.442695
        %v880 = vpow.pop %v879
        %v881 = vmul.f32 %v864, 1.442695
        %v882 = vpow.pop %v881
        %v883 = vmul.f32 %v865, 1.442695
        %v884 = vpow.pop %v883
        %v885 = vmul.f32 %v866, 1.442695
        %v886 = vpow.pop %v885
        %v887 = vmul.f32 %v867, 1.442695
        %v888 = vpow.pop %v887
        %v889 = vmul.f32 %v868, 1.442695
        %v890 = vpow.pop %v889
        %v891 = vmul.f32 %v869, 1.442695
        %v892 = vpow.pop %v891
        %v893 = vmul.f32 %v870, 1.442695
        %v894 = vpow.pop %v893
        %v895 = vmul.f32 %v871, 1.442695
        %v896 = vpow.pop %v895
        %v897 = vmul.f32 %v872, 1.442695
        %v898 = vpow.pop %v897
        %v899 = vmul.f32 %v873, 1.442695
        %v900 = vpow.pop %v899
        %v901 = vmul.f32 %v874, 1.442695
        %v902 = vpow.pop %v901
        %v903 = vmul.f32 %v875, 1.442695
        %v904 = vpow.pop %v903
        %v905 = vmul.f32 %v876, 1.442695
        %v906 = vpow.pop %v905
        %v907 = vmul.f32 %v877, 1.442695
        %v908 = vpow.pop %v907
        %v909 = vmul.f32 %v878, 1.442695
        %v910 = vpow.pop %v909
        %v911 = vadd.f32 %v880, 1.0
        %v912 = vadd.f32 %v882, 1.0
        %v913 = vadd.f32 %v884, 1.0
        %v914 = vadd.f32 %v886, 1.0
        %v915 = vadd.f32 %v888, 1.0
        %v916 = vadd.f32 %v890, 1.0
        %v917 = vadd.f32 %v892, 1.0
        %v918 = vadd.f32 %v894, 1.0
        %v919 = vadd.f32 %v896, 1.0
        %v920 = vadd.f32 %v898, 1.0
        %v921 = vadd.f32 %v900, 1.0
        %v922 = vadd.f32 %v902, 1.0
        %v923 = vadd.f32 %v904, 1.0
        %v924 = vadd.f32 %v906, 1.0
        %v925 = vadd.f32 %v908, 1.0
        %v926 = vadd.f32 %v910, 1.0
        %v927 = vrcp.pop %v911
        %v928 = vmul.f32 1.0, %v927
        %v929 = vrcp.pop %v912
        %v930 = vmul.f32 1.0, %v929
        %v931 = vrcp.pop %v913
        %v932 = vmul.f32 1.0, %v931
        %v933 = vrcp.pop %v914
        %v934 = vmul.f32 1.0, %v933
        %v935 = vrcp.pop %v915
        %v936 = vmul.f32 1.0, %v935
        %v937 = vrcp.pop %v916
        %v938 = vmul.f32 1.0, %v937
        %v939 = vrcp.pop %v917
        %v940 = vmul.f32 1.0, %v939
        %v941 = vrcp.pop %v918
        %v942 = vmul.f32 1.0, %v941
        %v943 = vrcp.pop %v919
        %v944 = vmul.f32 1.0, %v943
        %v945 = vrcp.pop %v920
        %v946 = vmul.f32 1.0, %v945
        %v947 = vrcp.pop %v921
        %v948 = vmul.f32 1.0, %v947
        %v949 = vrcp.pop %v922
        %v950 = vmul.f32 1.0, %v949
        %v951 = vrcp.pop %v923
        %v952 = vmul.f32 1.0, %v951
        %v953 = vrcp.pop %v924
        %v954 = vmul.f32 1.0, %v953
        %v955 = vrcp.pop %v925
        %v956 = vmul.f32 1.0, %v955
        %v957 = vrcp.pop %v926
        %v958 = vmul.f32 1.0, %v957
        %v959 = vmul.f32 %v752, %v928
        %v960 = vmul.f32 %v754, %v930
        %v961 = vmul.f32 %v756, %v932
        %v962 = vmul.f32 %v758, %v934
        %v963 = vmul.f32 %v762, %v936
        %v964 = vmul.f32 %v764, %v938
        %v965 = vmul.f32 %v766, %v940
        %v966 = vmul.f32 %v768, %v942
        %v967 = vmul.f32 %v772, %v944
        %v968 = vmul.f32 %v774, %v946
        %v969 = vmul.f32 %v776, %v948
        %v970 = vmul.f32 %v778, %v950
        %v971 = vmul.f32 %v782, %v952
        %v972 = vmul.f32 %v784, %v954
        %v973 = vmul.f32 %v786, %v956
        %v974 = vmul.f32 %v788, %v958
        %v975 = vmul.f32 %v959, %v825
        %v976 = vmul.f32 %v960, %v827
        %v977 = vmul.f32 %v961, %v829
        %v978 = vmul.f32 %v962, %v831
        %v979 = vmul.f32 %v963, %v835
        %v980 = vmul.f32 %v964, %v837
        %v981 = vmul.f32 %v965, %v839
        %v982 = vmul.f32 %v966, %v841
        %v983 = vmul.f32 %v967, %v845
        %v984 = vmul.f32 %v968, %v847
        %v985 = vmul.f32 %v969, %v849
        %v986 = vmul.f32 %v970, %v851
        %v987 = vmul.f32 %v971, %v855
        %v988 = vmul.f32 %v972, %v857
        %v989 = vmul.f32 %v973, %v859
        %v990 = vmul.f32 %v974, %v861
        %v991 = vpack.c.bf16 %v977, %v975
        %v992 = vpack.c.bf16 %v978, %v976
        %v993 = vpack.c.bf16 %v981, %v979
        %v994 = vpack.c.bf16 %v982, %v980
        %v995 = vpack.c.bf16 %v985, %v983
        %v996 = vpack.c.bf16 %v986, %v984
        %v997 = vpack.c.bf16 %v989, %v987
        %v998 = vpack.c.bf16 %v990, %v988
        %v999 = vld [vmem:[%s248] sm:$0xff]
        %v1000 = vld [vmem:[%s248 + $0x8] sm:$0xff]
        %v1001 = vld [vmem:[%s248 + $0x10] sm:$0xff]
        %v1002 = vld [vmem:[%s248 + $0x18] sm:$0xff]
        %v1003 = vld [vmem:[%s248 + $0x20] sm:$0xff]
        %v1004 = vld [vmem:[%s248 + $0x28] sm:$0xff]
        %v1005 = vld [vmem:[%s248 + $0x30] sm:$0xff]
        %v1006 = vld [vmem:[%s248 + $0x38] sm:$0xff]
        %v1007 = vld [vmem:[%s248 + $0x40] sm:$0xff]
        %v1008 = vld [vmem:[%s248 + $0x48] sm:$0xff]
        %v1009 = vld [vmem:[%s248 + $0x50] sm:$0xff]
        %v1010 = vld [vmem:[%s248 + $0x58] sm:$0xff]
        %v1011 = vld [vmem:[%s248 + $0x60] sm:$0xff]
        %v1012 = vld [vmem:[%s248 + $0x68] sm:$0xff]
        %v1013 = vld [vmem:[%s248 + $0x70] sm:$0xff]
        %v1014 = vld [vmem:[%s248 + $0x78] sm:$0xff]
        %v1015 = vld [vmem:[%s248 + $0x80] sm:$0xff]
        %v1016 = vld [vmem:[%s248 + $0x88] sm:$0xff]
        %v1017 = vld [vmem:[%s248 + $0x90] sm:$0xff]
        %v1018 = vld [vmem:[%s248 + $0x98] sm:$0xff]
        %v1019 = vld [vmem:[%s248 + $0xa0] sm:$0xff]
        %v1020 = vld [vmem:[%s248 + $0xa8] sm:$0xff]
        %v1021 = vld [vmem:[%s248 + $0xb0] sm:$0xff]
        %v1022 = vld [vmem:[%s248 + $0xb8] sm:$0xff]
        %v1023 = vld [vmem:[%s248 + $0xc0] sm:$0xff]
        %v1024 = vld [vmem:[%s248 + $0xc8] sm:$0xff]
        %v1025 = vld [vmem:[%s248 + $0xd0] sm:$0xff]
        %v1026 = vld [vmem:[%s248 + $0xd8] sm:$0xff]
        %v1027 = vld [vmem:[%s248 + $0xe0] sm:$0xff]
        %v1028 = vld [vmem:[%s248 + $0xe8] sm:$0xff]
        %v1029 = vld [vmem:[%s248 + $0xf0] sm:$0xff]
        %v1030 = vld [vmem:[%s248 + $0xf8] sm:$0xff]
        %v1063 = vunpack.c.l.b16 %v999
        %v1064 = vunpack.c.h.b16 %v999
        %v1065 = vunpack.c.l.b16 %v1000
        %v1066 = vunpack.c.h.b16 %v1000
        %v1067 = vunpack.c.l.b16 %v1001
        %v1068 = vunpack.c.h.b16 %v1001
        %v1069 = vunpack.c.l.b16 %v1002
        %v1070 = vunpack.c.h.b16 %v1002
        %v1071 = vunpack.c.l.b16 %v1003
        %v1072 = vunpack.c.h.b16 %v1003
        %v1073 = vunpack.c.l.b16 %v1004
        %v1074 = vunpack.c.h.b16 %v1004
        %v1075 = vunpack.c.l.b16 %v1005
        %v1076 = vunpack.c.h.b16 %v1005
        %v1077 = vunpack.c.l.b16 %v1006
        %v1078 = vunpack.c.h.b16 %v1006
        %v1079 = vunpack.c.l.b16 %v1007
        %v1080 = vunpack.c.h.b16 %v1007
        %v1081 = vunpack.c.l.b16 %v1008
        %v1082 = vunpack.c.h.b16 %v1008
        %v1083 = vunpack.c.l.b16 %v1009
        %v1084 = vunpack.c.h.b16 %v1009
        %v1085 = vunpack.c.l.b16 %v1010
        %v1086 = vunpack.c.h.b16 %v1010
        %v1087 = vunpack.c.l.b16 %v1011
        %v1088 = vunpack.c.h.b16 %v1011
        %v1089 = vunpack.c.l.b16 %v1012
        %v1090 = vunpack.c.h.b16 %v1012
        %v1091 = vunpack.c.l.b16 %v1013
        %v1092 = vunpack.c.h.b16 %v1013
        %v1093 = vunpack.c.l.b16 %v1014
        %v1094 = vunpack.c.h.b16 %v1014
        %v1095 = vunpack.c.l.b16 %v1015
        %v1096 = vunpack.c.h.b16 %v1015
        %v1097 = vunpack.c.l.b16 %v1016
        %v1098 = vunpack.c.h.b16 %v1016
        %v1099 = vunpack.c.l.b16 %v1017
        %v1100 = vunpack.c.h.b16 %v1017
        %v1101 = vunpack.c.l.b16 %v1018
        %v1102 = vunpack.c.h.b16 %v1018
        %v1103 = vunpack.c.l.b16 %v1019
        %v1104 = vunpack.c.h.b16 %v1019
        %v1105 = vunpack.c.l.b16 %v1020
        %v1106 = vunpack.c.h.b16 %v1020
        %v1107 = vunpack.c.l.b16 %v1021
        %v1108 = vunpack.c.h.b16 %v1021
        %v1109 = vunpack.c.l.b16 %v1022
        %v1110 = vunpack.c.h.b16 %v1022
        %v1111 = vunpack.c.l.b16 %v1023
        %v1112 = vunpack.c.h.b16 %v1023
        %v1113 = vunpack.c.l.b16 %v1024
        %v1114 = vunpack.c.h.b16 %v1024
        %v1115 = vunpack.c.l.b16 %v1025
        %v1116 = vunpack.c.h.b16 %v1025
        %v1117 = vunpack.c.l.b16 %v1026
        %v1118 = vunpack.c.h.b16 %v1026
        %v1119 = vunpack.c.l.b16 %v1027
        %v1120 = vunpack.c.h.b16 %v1027
        %v1121 = vunpack.c.l.b16 %v1028
        %v1122 = vunpack.c.h.b16 %v1028
        %v1123 = vunpack.c.l.b16 %v1029
        %v1124 = vunpack.c.h.b16 %v1029
        %v1125 = vunpack.c.l.b16 %v1030
        %v1126 = vunpack.c.h.b16 %v1030
        %v1127 = vpack.c.b16 %v1065, %v1063
        %v1128 = vpack.c.b16 %v1066, %v1064
        %v1129 = vpack.c.b16 %v1069, %v1067
        %v1130 = vpack.c.b16 %v1070, %v1068
        %v1131 = vpack.c.b16 %v1073, %v1071
        %v1132 = vpack.c.b16 %v1074, %v1072
        %v1133 = vpack.c.b16 %v1077, %v1075
        %v1134 = vpack.c.b16 %v1078, %v1076
        %v1135 = vpack.c.b16 %v1081, %v1079
        %v1136 = vpack.c.b16 %v1082, %v1080
        %v1137 = vpack.c.b16 %v1085, %v1083
        %v1138 = vpack.c.b16 %v1086, %v1084
        %v1139 = vpack.c.b16 %v1089, %v1087
        %v1140 = vpack.c.b16 %v1090, %v1088
        %v1141 = vpack.c.b16 %v1093, %v1091
        %v1142 = vpack.c.b16 %v1094, %v1092
        %v1143 = vpack.c.b16 %v1097, %v1095
        %v1144 = vpack.c.b16 %v1098, %v1096
        %v1145 = vpack.c.b16 %v1101, %v1099
        %v1146 = vpack.c.b16 %v1102, %v1100
        %v1147 = vpack.c.b16 %v1105, %v1103
        %v1148 = vpack.c.b16 %v1106, %v1104
        %v1149 = vpack.c.b16 %v1109, %v1107
        %v1150 = vpack.c.b16 %v1110, %v1108
        %v1151 = vpack.c.b16 %v1113, %v1111
        %v1152 = vpack.c.b16 %v1114, %v1112
        %v1153 = vpack.c.b16 %v1117, %v1115
        %v1154 = vpack.c.b16 %v1118, %v1116
        %v1155 = vpack.c.b16 %v1121, %v1119
        %v1156 = vpack.c.b16 %v1122, %v1120
        %v1157 = vpack.c.b16 %v1125, %v1123
        %v1158 = vpack.c.b16 %v1126, %v1124
        %1191 = vmatprep.subr.bf16.mxu0 %v1128
        %1192 = vmatpush1.bf16.msra.mxu0 %v1127
        %1193 = vmatprep.subr.bf16.mxu0 %v1130
        %1194 = vmatpush1.bf16.msra.mxu0 %v1129
        %1195 = vmatprep.subr.bf16.mxu0 %v1132
        %1196 = vmatpush1.bf16.msra.mxu0 %v1131
        %1197 = vmatprep.subr.bf16.mxu0 %v1134
        %1198 = vmatpush1.bf16.msra.mxu0 %v1133
        %1199 = vmatprep.subr.bf16.mxu0 %v1136
        %1200 = vmatpush1.bf16.msra.mxu0 %v1135
        %1201 = vmatprep.subr.bf16.mxu0 %v1138
        %1202 = vmatpush1.bf16.msra.mxu0 %v1137
        %1203 = vmatprep.subr.bf16.mxu0 %v1140
        %1204 = vmatpush1.bf16.msra.mxu0 %v1139
        %1205 = vmatprep.subr.bf16.mxu0 %v1142
        %1206 = vmatpush1.bf16.msra.mxu0 %v1141
        %1207 = vmatprep.subr.bf16.mxu0 %v1144
        %1208 = vmatpush1.bf16.msra.mxu0 %v1143
        %1209 = vmatprep.subr.bf16.mxu0 %v1146
        %1210 = vmatpush1.bf16.msra.mxu0 %v1145
        %1211 = vmatprep.subr.bf16.mxu0 %v1148
        %1212 = vmatpush1.bf16.msra.mxu0 %v1147
        %1213 = vmatprep.subr.bf16.mxu0 %v1150
        %1214 = vmatpush1.bf16.msra.mxu0 %v1149
        %1215 = vmatprep.subr.bf16.mxu0 %v1152
        %1216 = vmatpush1.bf16.msra.mxu0 %v1151
        %1217 = vmatprep.subr.bf16.mxu0 %v1154
        %1218 = vmatpush1.bf16.msra.mxu0 %v1153
        %1219 = vmatprep.subr.bf16.mxu0 %v1156
        %1220 = vmatpush1.bf16.msra.mxu0 %v1155
        %1221 = vmatprep.subr.bf16.mxu0 %v1158
        %1222 = vmatpush1.bf16.msra.mxu0 %v1157
        %1223 = vmatprep.mubr.bf16.mxu0 %v992
        %1224 = vmatmul.mubr.bf16.gmra.mrb[0].mxu0 %v991
        %v1225 = vpop.f32.mrb[0].mxu0
        %v1226 = vadd.f32 0.0, %v1225
        %v1227 = vpop.f32.mrb[0].mxu0
        %v1228 = vadd.f32 0.0, %v1227
        %v1229 = vpop.f32.mrb[0].mxu0
        %v1230 = vadd.f32 0.0, %v1229
        %v1231 = vpop.f32.mrb[0].mxu0
        %v1232 = vadd.f32 0.0, %v1231
        %1233 = vmatprep.mubr.bf16.mxu0 %v994
        %1234 = vmatmul.mubr.bf16.gmra.mrb[0].mxu0 %v993
        %v1235 = vpop.f32.mrb[0].mxu0
        %v1236 = vadd.f32 0.0, %v1235
        %v1237 = vpop.f32.mrb[0].mxu0
        %v1238 = vadd.f32 0.0, %v1237
        %v1239 = vpop.f32.mrb[0].mxu0
        %v1240 = vadd.f32 0.0, %v1239
        %v1241 = vpop.f32.mrb[0].mxu0
        %v1242 = vadd.f32 0.0, %v1241
        %1243 = vmatprep.mubr.bf16.mxu0 %v996
        %1244 = vmatmul.mubr.bf16.gmra.mrb[0].mxu0 %v995
        %v1245 = vpop.f32.mrb[0].mxu0
        %v1246 = vadd.f32 0.0, %v1245
        %v1247 = vpop.f32.mrb[0].mxu0
        %v1248 = vadd.f32 0.0, %v1247
        %v1249 = vpop.f32.mrb[0].mxu0
        %v1250 = vadd.f32 0.0, %v1249
        %v1251 = vpop.f32.mrb[0].mxu0
        %v1252 = vadd.f32 0.0, %v1251
        %1253 = vmatprep.mubr.bf16.mxu0 %v998
        %1254 = vmatmul.mubr.bf16.gmra.mrb[0].mxu0 %v997
        %v1255 = vpop.f32.mrb[0].mxu0
        %v1256 = vadd.f32 0.0, %v1255
        %v1257 = vpop.f32.mrb[0].mxu0
        %v1258 = vadd.f32 0.0, %v1257
        %v1259 = vpop.f32.mrb[0].mxu0
        %v1260 = vadd.f32 0.0, %v1259
        %v1261 = vpop.f32.mrb[0].mxu0
        %v1262 = vadd.f32 0.0, %v1261
        %1263 = vdwg.mxu0
        %p1264 = scmp.eq.s32.totalorder %s28, 0
        // Predicated region
        $region45: #{tpu_custom_call.1} parent=31 // pred_check
          %p1265 = pneg %p1264
        $region46: #{tpu_custom_call.1} parent=31 // pred_check_branch
          %1267 = sbr.rel (%p1265) target = $region48
        $region47: #{tpu_custom_call.1} parent=31 // pred_region
          %1268 = vst [vmem:[#allocation2] sm:$0xff] %v1226
          %1269 = vst [vmem:[#allocation2 + $0x8] sm:$0xff] %v1228
          %1270 = vst [vmem:[#allocation2 + $0x10] sm:$0xff] %v1230
          %1271 = vst [vmem:[#allocation2 + $0x18] sm:$0xff] %v1232
          %1272 = vst [vmem:[#allocation2 + $0x20] sm:$0xff] %v1236
          %1273 = vst [vmem:[#allocation2 + $0x28] sm:$0xff] %v1238
          %1274 = vst [vmem:[#allocation2 + $0x30] sm:$0xff] %v1240
          %1275 = vst [vmem:[#allocation2 + $0x38] sm:$0xff] %v1242
          %1276 = vst [vmem:[#allocation2 + $0x40] sm:$0xff] %v1246
          %1277 = vst [vmem:[#allocation2 + $0x48] sm:$0xff] %v1248
          %1278 = vst [vmem:[#allocation2 + $0x50] sm:$0xff] %v1250
          %1279 = vst [vmem:[#allocation2 + $0x58] sm:$0xff] %v1252
          %1280 = vst [vmem:[#allocation2 + $0x60] sm:$0xff] %v1256
          %1281 = vst [vmem:[#allocation2 + $0x68] sm:$0xff] %v1258
          %1282 = vst [vmem:[#allocation2 + $0x70] sm:$0xff] %v1260
          %1283 = vst [vmem:[#allocation2 + $0x78] sm:$0xff] %v1262
        $region48: #{tpu_custom_call.1} parent=31 // pred_fallthru
          _
        %p1284 = scmp.ne.s32.totalorder %s28, 0
        // Predicated region
        $region49: #{tpu_custom_call.1} parent=31 // pred_check
          %p1285 = pneg %p1284
        $region50: #{tpu_custom_call.1} parent=31 // pred_check_branch
          %1287 = sbr.rel (%p1285) target = $region52
        $region51: #{tpu_custom_call.1} parent=31 // pred_region
          %v1288 = vld [vmem:[#allocation2] sm:$0xff]
          %v1289 = vld [vmem:[#allocation2 + $0x8] sm:$0xff]
          %v1290 = vld [vmem:[#allocation2 + $0x10] sm:$0xff]
          %v1291 = vld [vmem:[#allocation2 + $0x18] sm:$0xff]
          %v1292 = vld [vmem:[#allocation2 + $0x20] sm:$0xff]
          %v1293 = vld [vmem:[#allocation2 + $0x28] sm:$0xff]
          %v1294 = vld [vmem:[#allocation2 + $0x30] sm:$0xff]
          %v1295 = vld [vmem:[#allocation2 + $0x38] sm:$0xff]
          %v1296 = vld [vmem:[#allocation2 + $0x40] sm:$0xff]
          %v1297 = vld [vmem:[#allocation2 + $0x48] sm:$0xff]
          %v1298 = vld [vmem:[#allocation2 + $0x50] sm:$0xff]
          %v1299 = vld [vmem:[#allocation2 + $0x58] sm:$0xff]
          %v1300 = vld [vmem:[#allocation2 + $0x60] sm:$0xff]
          %v1301 = vld [vmem:[#allocation2 + $0x68] sm:$0xff]
          %v1302 = vld [vmem:[#allocation2 + $0x70] sm:$0xff]
          %v1303 = vld [vmem:[#allocation2 + $0x78] sm:$0xff]
          %v1304 = vadd.f32 %v1288, %v1226
          %v1305 = vadd.f32 %v1289, %v1228
          %v1306 = vadd.f32 %v1290, %v1230
          %v1307 = vadd.f32 %v1291, %v1232
          %v1308 = vadd.f32 %v1292, %v1236
          %v1309 = vadd.f32 %v1293, %v1238
          %v1310 = vadd.f32 %v1294, %v1240
          %v1311 = vadd.f32 %v1295, %v1242
          %v1312 = vadd.f32 %v1296, %v1246
          %v1313 = vadd.f32 %v1297, %v1248
          %v1314 = vadd.f32 %v1298, %v1250
          %v1315 = vadd.f32 %v1299, %v1252
          %v1316 = vadd.f32 %v1300, %v1256
          %v1317 = vadd.f32 %v1301, %v1258
          %v1318 = vadd.f32 %v1302, %v1260
          %v1319 = vadd.f32 %v1303, %v1262
          %1320 = vst [vmem:[#allocation2] sm:$0xff] %v1304
          %1321 = vst [vmem:[#allocation2 + $0x8] sm:$0xff] %v1305
          %1322 = vst [vmem:[#allocation2 + $0x10] sm:$0xff] %v1306
          %1323 = vst [vmem:[#allocation2 + $0x18] sm:$0xff] %v1307
          %1324 = vst [vmem:[#allocation2 + $0x20] sm:$0xff] %v1308
          %1325 = vst [vmem:[#allocation2 + $0x28] sm:$0xff] %v1309
          %1326 = vst [vmem:[#allocation2 + $0x30] sm:$0xff] %v1310
          %1327 = vst [vmem:[#allocation2 + $0x38] sm:$0xff] %v1311
          %1328 = vst [vmem:[#allocation2 + $0x40] sm:$0xff] %v1312
          %1329 = vst [vmem:[#allocation2 + $0x48] sm:$0xff] %v1313
          %1330 = vst [vmem:[#allocation2 + $0x50] sm:$0xff] %v1314
          %1331 = vst [vmem:[#allocation2 + $0x58] sm:$0xff] %v1315
          %1332 = vst [vmem:[#allocation2 + $0x60] sm:$0xff] %v1316
          %1333 = vst [vmem:[#allocation2 + $0x68] sm:$0xff] %v1317
          %1334 = vst [vmem:[#allocation2 + $0x70] sm:$0xff] %v1318
          %1335 = vst [vmem:[#allocation2 + $0x78] sm:$0xff] %v1319
        $region52: #{tpu_custom_call.1} parent=31 // pred_fallthru
          _
        %p1336 = scmp.eq.s32.totalorder %s28, 1
        // Predicated region
        $region53: #{tpu_custom_call.1} parent=31 // pred_check
          %p1337 = pneg %p1336
        $region54: #{tpu_custom_call.1} parent=31 // pred_check_branch
          %1339 = sbr.rel (%p1337) target = $region56
        $region55: #{tpu_custom_call.1} parent=31 // pred_region
          %v1340 = vld [vmem:[#allocation2] sm:$0xff]
          %v1341 = vld [vmem:[#allocation2 + $0x8] sm:$0xff]
          %v1342 = vld [vmem:[#allocation2 + $0x10] sm:$0xff]
          %v1343 = vld [vmem:[#allocation2 + $0x18] sm:$0xff]
          %v1344 = vld [vmem:[#allocation2 + $0x20] sm:$0xff]
          %v1345 = vld [vmem:[#allocation2 + $0x28] sm:$0xff]
          %v1346 = vld [vmem:[#allocation2 + $0x30] sm:$0xff]
          %v1347 = vld [vmem:[#allocation2 + $0x38] sm:$0xff]
          %v1348 = vld [vmem:[#allocation2 + $0x40] sm:$0xff]
          %v1349 = vld [vmem:[#allocation2 + $0x48] sm:$0xff]
          %v1350 = vld [vmem:[#allocation2 + $0x50] sm:$0xff]
          %v1351 = vld [vmem:[#allocation2 + $0x58] sm:$0xff]
          %v1352 = vld [vmem:[#allocation2 + $0x60] sm:$0xff]
          %v1353 = vld [vmem:[#allocation2 + $0x68] sm:$0xff]
          %v1354 = vld [vmem:[#allocation2 + $0x70] sm:$0xff]
          %v1355 = vld [vmem:[#allocation2 + $0x78] sm:$0xff]
          %v1356 = vpack.c.bf16 %v1342, %v1340
          %v1357 = vpack.c.bf16 %v1343, %v1341
          %v1358 = vpack.c.bf16 %v1346, %v1344
          %v1359 = vpack.c.bf16 %v1347, %v1345
          %v1360 = vpack.c.bf16 %v1350, %v1348
          %v1361 = vpack.c.bf16 %v1351, %v1349
          %v1362 = vpack.c.bf16 %v1354, %v1352
          %v1363 = vpack.c.bf16 %v1355, %v1353
          %v1372 = vunpack.c.l.b16 %v1356
          %v1373 = vunpack.c.l.b16 %v1357
          %v1374 = vunpack.c.h.b16 %v1356
          %v1375 = vunpack.c.h.b16 %v1357
          %v1376 = vunpack.c.l.b16 %v1358
          %v1377 = vunpack.c.l.b16 %v1359
          %v1378 = vunpack.c.h.b16 %v1358
          %v1379 = vunpack.c.h.b16 %v1359
          %v1380 = vunpack.c.l.b16 %v1360
          %v1381 = vunpack.c.l.b16 %v1361
          %v1382 = vunpack.c.h.b16 %v1360
          %v1383 = vunpack.c.h.b16 %v1361
          %v1384 = vunpack.c.l.b16 %v1362
          %v1385 = vunpack.c.l.b16 %v1363
          %v1386 = vunpack.c.h.b16 %v1362
          %v1387 = vunpack.c.h.b16 %v1363
          %v1388 = vpack.c.b16 %v1373, %v1372
          %v1389 = vpack.c.b16 %v1375, %v1374
          %v1390 = vpack.c.b16 %v1377, %v1376
          %v1391 = vpack.c.b16 %v1379, %v1378
          %v1392 = vpack.c.b16 %v1381, %v1380
          %v1393 = vpack.c.b16 %v1383, %v1382
          %v1394 = vpack.c.b16 %v1385, %v1384
          %v1395 = vpack.c.b16 %v1387, %v1386
          %1404 = vst [vmem:[%s280] sm:$0xff] %v1388
          %1405 = vst [vmem:[%s280 + $0x8] sm:$0xff] %v1389
          %1406 = vst [vmem:[%s280 + $0x10] sm:$0xff] %v1390
          %1407 = vst [vmem:[%s280 + $0x18] sm:$0xff] %v1391
          %1408 = vst [vmem:[%s280 + $0x20] sm:$0xff] %v1392
          %1409 = vst [vmem:[%s280 + $0x28] sm:$0xff] %v1393
          %1410 = vst [vmem:[%s280 + $0x30] sm:$0xff] %v1394
          %1411 = vst [vmem:[%s280 + $0x38] sm:$0xff] %v1395
        $region56: #{tpu_custom_call.1} parent=31 // pred_fallthru
          _
        %s1412 = sand.u32 %s121, 1
        %s1413 = scalar_lea.sflag [#allocation5], %s1412
        %s1414 = sand.u32 %s121, 1
        %s1415 = smul.addr %s1414, 64
        %s1416 = scalar_lea.vmem [#allocation9], %s1415
        // Predicated region
        $region57: #{tpu_custom_call.1} parent=31 // pred_check
          %p1417 = pneg %p131
        $region58: #{tpu_custom_call.1} parent=31 // pred_check_branch
          %1419 = sbr.rel (%p1417) target = $region60
        $region59: #{tpu_custom_call.1} parent=31 // pred_region
          %s1420 = smul.u32 8, %s27
          %s1422 = ssub.s32 1024, 1024
          %1423 = vsyncadd %s1413, %s1422
          %s1424 = smul.addr %s1420, 2
          %s1425 = smul.addr %s1424, 64
          %s1426 = scalar_lea.hbm %s3, %s1425
          %s1427 = sshll.u32 %s1416, 4
          %s1428 = int_to_ptr.vmem [resolvable:$true] %s1427
          %1433 = dma.vmem_to_hbm [thread:$0]  %s1428, 1024, %s1426, %s1413, 128, 128, 8
        $region60: #{tpu_custom_call.1} parent=31 // pred_fallthru
          _
      $region32: #{tpu_custom_call.1} parent=5 // pred_fallthru
        _
      %p1434 = scmp.le.s32.totalorder 2, %s18
      // Predicated region
      $region61: #{tpu_custom_call.1} parent=5 // pred_check
        %p1435 = pneg %p1434
      $region62: #{tpu_custom_call.1} parent=5 // pred_check_branch
        %1437 = sbr.rel (%p1435) target = $region64
      $region63: #{tpu_custom_call.1} parent=5 // pred_region
        %s1438 = ssub.s32 %s18, 2
        // Predicated region
        $region65: #{tpu_custom_call.1} parent=63 // pred_check
          %p1439 = pneg %p137
        $region66: #{tpu_custom_call.1} parent=63 // pred_check_branch
          %1441 = sbr.rel (%p1439) target = $region68
        $region67: #{tpu_custom_call.1} parent=63 // pred_region
          %s1442 = sand.u32 %s122, 1
          %s1443 = scalar_lea.sflag [#allocation5], %s1442
          %s1444 = sand.u32 %s122, 1
          %s1445 = smul.addr %s1444, 64
          %s1446 = scalar_lea.vmem [#allocation9], %s1445
          %1447 = dma.done %s1443, 1024
        $region68: #{tpu_custom_call.1} parent=63 // pred_fallthru
          _
      $region64: #{tpu_custom_call.1} parent=5 // pred_fallthru
        _
    $region6: #{tpu_custom_call.1} parent=1 // loop_footer
      %s22 = sadd.s32 1, %s18
    $region7: #{tpu_custom_call.1} parent=1 // loop_footer_branch
      %17 = sbr.rel target = $region3
    $region8: #{tpu_custom_call.1} parent=1 // loop_exit
      _
    %1448 = vsyncpa [#allocation4], 1
    %s1449 = scalar_lea.sflag [#allocation4], 1
    %1450 = vsyncpa %s1449, 1
    %1451 = vsyncpa [#allocation7], 1
    %s1452 = scalar_lea.sflag [#allocation7], 1
    %1453 = vsyncpa %s1452, 1
    %1454 = vsyncpa [#allocation5], 1
    %s1455 = scalar_lea.sflag [#allocation5], 1
    %1456 = vsyncpa %s1455, 1

</llo_original>
